<compile_context>
chip_gen: v6e
topology: v6e:2x2x1
jax: 0.10.0
libtpu: 0.0.40
codegen_flags: <defaults>
</compile_context>

<pallas_src>
import jax
import jax.numpy as jnp
from jax.experimental import pallas as pl
from jax.experimental.pallas import tpu as pltpu

SIGMA_MIN = 1e-4


def _cdiv(a, b):
    return (a + b - 1) // b


def _round_up(a, b):
    return _cdiv(a, b) * b


def _fm_loss_kernel(M, Dp, Cp, steps, tile_m, need_mask):
    def kernel(x_ref, z_ref, cond_ref, w1_ref, b1_ref, w2_ref, b2_ref,
               out_ref, inp_ref, acc_ref):
        i = pl.program_id(0)      # row split (parallel across TensorCores)
        j = pl.program_id(1)      # reduction over row tiles within the split

        @pl.when(j == 0)
        def _():
            acc_ref[...] = jnp.zeros_like(acc_ref)

        x = x_ref[...]            # (TM, Dp) f32
        z = z_ref[...]            # (TM, Dp) f32
        cond = cond_ref[...]      # (TM, Cp) f32; lane 0 holds t
        t = cond[:, 0:1]          # (TM, 1)

        # y = (1 - t) * x + (sigma_min + (1 - sigma_min) * t) * z
        y = (1.0 - t) * x + (SIGMA_MIN + (1.0 - SIGMA_MIN) * t) * z
        # u = (1 - sigma_min) * z - x
        u = (1.0 - SIGMA_MIN) * z - x

        # Stage fused first-layer operand [y | t, cond] in VMEM -> one matmul.
        inp_ref[:, :Dp] = y
        inp_ref[:, Dp:Dp + Cp] = cond

        h = jnp.tanh(
            jnp.dot(inp_ref[...], w1_ref[...], preferred_element_type=jnp.float32)
            + b1_ref[...])
        v_out = (jnp.dot(h, w2_ref[...], preferred_element_type=jnp.float32)
                 + b2_ref[...])

        diff = v_out - u            # padded D columns are exactly zero

        if need_mask:               # static: only emitted when rows were padded
            row0 = (i * steps + j) * tile_m
            rows = row0 + jax.lax.broadcasted_iota(jnp.int32, diff.shape, 0)
            diff = jnp.where(rows < M, diff, 0.0)

        # Pure-VPU elementwise accumulation; no per-step cross-lane reduce.
        acc_ref[...] += diff * diff

        @pl.when(j == steps - 1)
        def _():
            # One sublane reduce per split; the final tiny sum + mean divide
            # happen in the XLA wrapper.
            out_ref[0] = jnp.sum(acc_ref[...], axis=0, keepdims=True)

    return kernel


def flow_matching_loss(x, cond, t, z, params, *, tile_m=1024, row_splits=2):
    """x:(B,S,D) cond:(B,S,C) t:(B,S,1) z:(B,S,D) -> scalar MSE loss."""
    B, S, D = x.shape
    C = cond.shape[-1]
    H = params["w1y"].shape[1]
    M = B * S
    f32 = jnp.float32

    # Lane-dense padded feature widths.
    Dp = _round_up(D, 128)
    Cp = _round_up(C + 1, 128)     # [t | cond] packed into one streamed block
    Hp = _round_up(H, 128)

    # Row tiling: big tiles for real workloads, shrunk for tiny M; pad M.
    row_splits = max(1, int(row_splits))
    tile_m = max(8, min(_round_up(int(tile_m), 8),
                        _round_up(_cdiv(M, row_splits), 8)))
    steps = _cdiv(M, row_splits * tile_m)
    Mp = row_splits * steps * tile_m
    need_mask = (Mp != M)

    x2 = jnp.pad(x.reshape(M, D).astype(f32), ((0, Mp - M), (0, Dp - D)))
    z2 = jnp.pad(z.reshape(M, D).astype(f32), ((0, Mp - M), (0, Dp - D)))
    c2 = jnp.pad(
        jnp.concatenate([t.reshape(M, 1), cond.reshape(M, C)], axis=-1).astype(f32),
        ((0, Mp - M), (0, Cp - (C + 1))))

    # Pack + zero-pad the velocity-net weights for the fused first layer.
    w1 = jnp.zeros((Dp + Cp, Hp), f32)
    w1 = w1.at[:D, :H].set(params["w1y"].astype(f32))
    w1 = w1.at[Dp, :H].set(params["w1t"].astype(f32)[0])       # t column
    w1 = w1.at[Dp + 1:Dp + 1 + C, :H].set(params["w1c"].astype(f32))
    b1 = jnp.zeros((1, Hp), f32).at[:, :H].set(params["b1"].astype(f32))
    w2 = jnp.zeros((Hp, Dp), f32).at[:H, :D].set(params["w2"].astype(f32))
    b2 = jnp.zeros((1, Dp), f32).at[:, :D].set(params["b2"].astype(f32))

    def row_spec(width):
        return pl.BlockSpec((tile_m, width), lambda i, j: (i * steps + j, 0))

    def full_spec(shape):
        return pl.BlockSpec(shape, lambda i, j: (0, 0))

    # VMEM budget: double-buffered streamed tiles + weights + scratch + slack.
    tile_bytes = tile_m * (2 * Dp + Cp) * 4
    weight_bytes = ((Dp + Cp) * Hp + Hp + Hp * Dp + Dp) * 4
    scratch_bytes = tile_m * (2 * Dp + Cp) * 4
    vmem_needed = 2 * tile_bytes + 2 * weight_bytes + scratch_bytes + (2 << 20)
    vmem_limit = int(min(max(vmem_needed, 16 << 20), 64 << 20))

    partial = pl.pallas_call(
        _fm_loss_kernel(M, Dp, Cp, steps, tile_m, need_mask),
        out_shape=jax.ShapeDtypeStruct((row_splits, 1, Dp), f32),
        grid_spec=pltpu.PrefetchScalarGridSpec(
            num_scalar_prefetch=0,
            grid=(row_splits, steps),
            in_specs=[
                row_spec(Dp),               # x
                row_spec(Dp),               # z
                row_spec(Cp),               # [t | cond]
                full_spec((Dp + Cp, Hp)),   # fused W1 = [W1y; w1t; W1c] (padded)
                full_spec((1, Hp)),         # b1
                full_spec((Hp, Dp)),        # W2
                full_spec((1, Dp)),         # b2
            ],
            out_specs=pl.BlockSpec((1, 1, Dp), lambda i, j: (i, 0, 0)),
            scratch_shapes=[
                pltpu.VMEM((tile_m, Dp + Cp), f32),   # fused matmul operand
                pltpu.VMEM((tile_m, Dp), f32),        # squared-error accumulator
            ],
        ),
        compiler_params=pltpu.CompilerParams(
            dimension_semantics=("parallel", "arbitrary"),
            vmem_limit_bytes=vmem_limit),
    )(x2, z2, c2, w1, b1, w2, b2)

    return jnp.sum(partial) / jnp.float32(M * D)


def make_params(D, C, H, key):
    """Deterministic synthetic velocity-net parameters."""
    ks = jax.random.split(key, 4)
    s1 = 1.0 / jnp.sqrt(jnp.float32(D + C + 1))
    s2 = 1.0 / jnp.sqrt(jnp.float32(H))
    return {
        "w1y": jax.random.normal(ks[0], (D, H), jnp.float32) * s1,
        "w1c": jax.random.normal(ks[1], (C, H), jnp.float32) * s1,
        "w1t": jax.random.normal(ks[2], (1, H), jnp.float32) * s1,
        "b1": jnp.zeros((1, H), jnp.float32),
        "w2": jax.random.normal(ks[3], (H, D), jnp.float32) * s2,
        "b2": jnp.zeros((1, D), jnp.float32),
    }


def reference_loss(x, cond, t, z, params):
    """Pure-JAX reference of the same forward for a sanity check."""
    y = (1.0 - t) * x + (SIGMA_MIN + (1.0 - SIGMA_MIN) * t) * z
    u = (1.0 - SIGMA_MIN) * z - x
    h = jnp.tanh(y @ params["w1y"] + cond @ params["w1c"]
                 + t * params["w1t"] + params["b1"])
    v_out = h @ params["w2"] + params["b2"]
    return jnp.mean((v_out - u) ** 2)


if __name__ == "__main__":
    def run_case(B, S, D, C, H, key):
        kx, kc, kt, kz, kp = jax.random.split(key, 5)
        x = jax.random.normal(kx, (B, S, D), jnp.float32)
        cond = jax.random.normal(kc, (B, S, C), jnp.float32)
        t = jax.random.uniform(kt, (B, S, 1), jnp.float32)
        z = jax.random.normal(kz, (B, S, D), jnp.float32)
        params = make_params(D, C, H, kp)
        loss = flow_matching_loss(x, cond, t, z, params)
        jax.block_until_ready(loss)
        ref = reference_loss(x, cond, t, z, params)
        assert jnp.allclose(loss, ref, rtol=1e-5, atol=1e-5), (loss, ref)

    k1, k2 = jax.random.split(jax.random.PRNGKey(0))
    run_case(2, 8, 32, 16, 32, k1)   # even shapes, no row padding
    run_case(3, 5, 32, 16, 32, k2)   # M=15 -> exercises padded-row masking path
    print("KERNEL_OK")
</pallas_src>

<mosaic_0001>
module attributes {stable_mosaic.version = 11 : i64} {
  func.func @kernel(%arg0: i32, %arg1: i32, %arg2: memref<8x128xf32, #tpu.memory_space<vmem>>, %arg3: memref<8x128xf32, #tpu.memory_space<vmem>>, %arg4: memref<8x128xf32, #tpu.memory_space<vmem>>, %arg5: memref<256x128xf32, #tpu.memory_space<vmem>>, %arg6: memref<1x128xf32, #tpu.memory_space<vmem>>, %arg7: memref<128x128xf32, #tpu.memory_space<vmem>>, %arg8: memref<1x128xf32, #tpu.memory_space<vmem>>, %arg9: memref<1x1x128xf32, #tpu.memory_space<vmem>>, %arg10: memref<8x256xf32, #tpu.memory_space<vmem>>, %arg11: memref<8x128xf32, #tpu.memory_space<vmem>>) attributes {dimension_semantics = [#tpu.dimension_semantics<parallel>, #tpu.dimension_semantics<arbitrary>], iteration_bounds = array<i64: 2, 1>, scalar_prefetch = 0 : i64, scratch_operands = 2 : i64, tpu.core_type = #tpu.core_type<tc>, window_params = [{transform_indices = @transform_0, window_bounds = array<i64: 8, 128>}, {transform_indices = @transform_1, window_bounds = array<i64: 8, 128>}, {transform_indices = @transform_2, window_bounds = array<i64: 8, 128>}, {pipeline_mode = #tpu.pipeline_mode<synchronous>, transform_indices = @transform_3, window_bounds = array<i64: 256, 128>}, {pipeline_mode = #tpu.pipeline_mode<synchronous>, transform_indices = @transform_4, window_bounds = array<i64: 1, 128>}, {pipeline_mode = #tpu.pipeline_mode<synchronous>, transform_indices = @transform_5, window_bounds = array<i64: 128, 128>}, {pipeline_mode = #tpu.pipeline_mode<synchronous>, transform_indices = @transform_6, window_bounds = array<i64: 1, 128>}, {transform_indices = @transform_7, window_bounds = array<i64: 1, 1, 128>}]} {
    %c0_i32 = arith.constant 0 : i32
    %0 = arith.cmpi eq, %arg1, %c0_i32 : i32
    %1 = arith.extui %0 : i1 to i32
    %c0_i32_0 = arith.constant 0 : i32
    %2 = arith.cmpi ne, %1, %c0_i32_0 : i32
    scf.if %2 {
      %cst_30 = arith.constant 0.000000e+00 : f32
      %43 = vector.broadcast %cst_30 : f32 to vector<8x128xf32>
      %c0_31 = arith.constant 0 : index
      %c0_32 = arith.constant 0 : index
      %44 = vector.load %arg11[%c0_31, %c0_32] : memref<8x128xf32, #tpu.memory_space<vmem>>, vector<8x128xf32>
      tpu.vector_store %arg11[%c0_31, %c0_32], %43 {strides = array<i32>} : memref<8x128xf32, #tpu.memory_space<vmem>>, vector<8x128xf32>,
    } else {
    }
    %c0 = arith.constant 0 : index
    %c0_1 = arith.constant 0 : index
    %3 = vector.load %arg2[%c0, %c0_1] : memref<8x128xf32, #tpu.memory_space<vmem>>, vector<8x128xf32>
    %c0_2 = arith.constant 0 : index
    %c0_3 = arith.constant 0 : index
    %4 = vector.load %arg3[%c0_2, %c0_3] : memref<8x128xf32, #tpu.memory_space<vmem>>, vector<8x128xf32>
    %c0_4 = arith.constant 0 : index
    %c0_5 = arith.constant 0 : index
    %5 = vector.load %arg4[%c0_4, %c0_5] : memref<8x128xf32, #tpu.memory_space<vmem>>, vector<8x128xf32>
    %6 = vector.extract_strided_slice %5 {offsets = [0, 0], sizes = [8, 1], strides = [1, 1]} : vector<8x128xf32> to vector<8x1xf32>
    %cst = arith.constant 1.000000e+00 : f32
    %7 = vector.broadcast %cst : f32 to vector<8x1xf32>
    %8 = arith.subf %7, %6 : vector<8x1xf32>
    %9 = vector.broadcast %8 : vector<8x1xf32> to vector<8x128xf32>
    %10 = arith.mulf %9, %3 : vector<8x128xf32>
    %cst_6 = arith.constant 0.999899983 : f32
    %11 = vector.broadcast %cst_6 : f32 to vector<8x1xf32>
    %12 = arith.mulf %11, %6 : vector<8x1xf32>
    %cst_7 = arith.constant 9.99999974E-5 : f32
    %13 = vector.broadcast %cst_7 : f32 to vector<8x1xf32>
    %14 = arith.addf %13, %12 : vector<8x1xf32>
    %15 = vector.broadcast %14 : vector<8x1xf32> to vector<8x128xf32>
    %16 = arith.mulf %15, %4 : vector<8x128xf32>
    %17 = arith.addf %10, %16 : vector<8x128xf32>
    %cst_8 = arith.constant 0.999899983 : f32
    %18 = vector.broadcast %cst_8 : f32 to vector<8x128xf32>
    %19 = arith.mulf %18, %4 : vector<8x128xf32>
    %20 = arith.subf %19, %3 : vector<8x128xf32>
    %c0_9 = arith.constant 0 : index
    %c0_10 = arith.constant 0 : index
    %21 = vector.load %arg10[%c0_9, %c0_10] : memref<8x256xf32, #tpu.memory_space<vmem>>, vector<8x128xf32>
    tpu.vector_store %arg10[%c0_9, %c0_10], %17 {strides = array<i32>} : memref<8x256xf32, #tpu.memory_space<vmem>>, vector<8x128xf32>,
    %c0_11 = arith.constant 0 : index
    %c128 = arith.constant 128 : index
    %22 = vector.load %arg10[%c0_11, %c128] : memref<8x256xf32, #tpu.memory_space<vmem>>, vector<8x128xf32>
    tpu.vector_store %arg10[%c0_11, %c128], %5 {strides = array<i32>} : memref<8x256xf32, #tpu.memory_space<vmem>>, vector<8x128xf32>,
    %c0_12 = arith.constant 0 : index
    %c0_13 = arith.constant 0 : index
    %23 = vector.load %arg10[%c0_12, %c0_13] : memref<8x256xf32, #tpu.memory_space<vmem>>, vector<8x256xf32>
    %c0_14 = arith.constant 0 : index
    %c0_15 = arith.constant 0 : index
    %24 = vector.load %arg5[%c0_14, %c0_15] : memref<256x128xf32, #tpu.memory_space<vmem>>, vector<256x128xf32>
    %cst_16 = arith.constant dense<0.000000e+00> : vector<8x128xf32>
    %25 = tpu.matmul %23, %24, %cst_16 {dimension_numbers = #tpu.dot_dimension_numbers<[1], [0], [0], [1], [0, 0, 1, 1], [], []>} : vector<8x256xf32>, vector<256x128xf32>, vector<8x128xf32> -> vector<8x128xf32>
    %c0_17 = arith.constant 0 : index
    %c0_18 = arith.constant 0 : index
    %26 = vector.load %arg6[%c0_17, %c0_18] : memref<1x128xf32, #tpu.memory_space<vmem>>, vector<1x128xf32>
    %27 = vector.broadcast %26 : vector<1x128xf32> to vector<8x128xf32>
    %28 = arith.addf %25, %27 : vector<8x128xf32>
    %29 = math.tanh %28 : vector<8x128xf32>
    %c0_19 = arith.constant 0 : index
    %c0_20 = arith.constant 0 : index
    %30 = vector.load %arg7[%c0_19, %c0_20] : memref<128x128xf32, #tpu.memory_space<vmem>>, vector<128x128xf32>
    %cst_21 = arith.constant dense<0.000000e+00> : vector<8x128xf32>
    %31 = tpu.matmul %29, %30, %cst_21 {dimension_numbers = #tpu.dot_dimension_numbers<[1], [0], [0], [1], [0, 0, 1, 1], [], []>} : vector<8x128xf32>, vector<128x128xf32>, vector<8x128xf32> -> vector<8x128xf32>
    %c0_22 = arith.constant 0 : index
    %c0_23 = arith.constant 0 : index
    %32 = vector.load %arg8[%c0_22, %c0_23] : memref<1x128xf32, #tpu.memory_space<vmem>>, vector<1x128xf32>
    %33 = vector.broadcast %32 : vector<1x128xf32> to vector<8x128xf32>
    %34 = arith.addf %31, %33 : vector<8x128xf32>
    %35 = arith.subf %34, %20 : vector<8x128xf32>
    %c0_24 = arith.constant 0 : index
    %c0_25 = arith.constant 0 : index
    %36 = vector.load %arg11[%c0_24, %c0_25] : memref<8x128xf32, #tpu.memory_space<vmem>>, vector<8x128xf32>
    %37 = arith.mulf %35, %35 : vector<8x128xf32>
    %38 = arith.addf %36, %37 : vector<8x128xf32>
    %c0_26 = arith.constant 0 : index
    %c0_27 = arith.constant 0 : index
    %39 = vector.load %arg11[%c0_26, %c0_27] : memref<8x128xf32, #tpu.memory_space<vmem>>, vector<8x128xf32>
    tpu.vector_store %arg11[%c0_26, %c0_27], %38 {strides = array<i32>} : memref<8x128xf32, #tpu.memory_space<vmem>>, vector<8x128xf32>,
    %c0_i32_28 = arith.constant 0 : i32
    %40 = arith.cmpi eq, %arg1, %c0_i32_28 : i32
    %41 = arith.extui %40 : i1 to i32
    %c0_i32_29 = arith.constant 0 : i32
    %42 = arith.cmpi ne, %41, %c0_i32_29 : i32
    scf.if %42 {
      %c0_30 = arith.constant 0 : index
      %c0_31 = arith.constant 0 : index
      %43 = vector.load %arg11[%c0_30, %c0_31] : memref<8x128xf32, #tpu.memory_space<vmem>>, vector<8x128xf32>
      %cst_32 = arith.constant dense<0.000000e+00> : vector<128xf32>
      %44 = vector.multi_reduction <add>, %43, %cst_32 [0] : vector<8x128xf32> to vector<128xf32>
      %45 = vector.shape_cast %44 : vector<128xf32> to vector<1x128xf32>
      %c0_33 = arith.constant 0 : index
      %c0_34 = arith.constant 0 : index
      %c0_35 = arith.constant 0 : index
      %46 = vector.load %arg9[%c0_33, %c0_34, %c0_35] : memref<1x1x128xf32, #tpu.memory_space<vmem>>, vector<1x1x128xf32>
      %47 = vector.shape_cast %46 : vector<1x1x128xf32> to vector<1x128xf32>
      %48 = vector.shape_cast %45 : vector<1x128xf32> to vector<1x1x128xf32>
      tpu.vector_store %arg9[%c0_33, %c0_34, %c0_35], %48 {strides = array<i32>} : memref<1x1x128xf32, #tpu.memory_space<vmem>>, vector<1x1x128xf32>,
    } else {
    }
    return
  }
  func.func @transform_0(%arg0: i32, %arg1: i32) -> (i32, i32) {
    %c1_i32 = arith.constant 1 : i32
    %0 = arith.muli %arg0, %c1_i32 : i32
    %1 = arith.addi %0, %arg1 : i32
    %c0_i32 = arith.constant 0 : i32
    %c0_i32_0 = arith.constant 0 : i32
    return %1, %c0_i32 : i32, i32
  }
  func.func @transform_1(%arg0: i32, %arg1: i32) -> (i32, i32) {
    %c1_i32 = arith.constant 1 : i32
    %0 = arith.muli %arg0, %c1_i32 : i32
    %1 = arith.addi %0, %arg1 : i32
    %c0_i32 = arith.constant 0 : i32
    %c0_i32_0 = arith.constant 0 : i32
    return %1, %c0_i32 : i32, i32
  }
  func.func @transform_2(%arg0: i32, %arg1: i32) -> (i32, i32) {
    %c1_i32 = arith.constant 1 : i32
    %0 = arith.muli %arg0, %c1_i32 : i32
    %1 = arith.addi %0, %arg1 : i32
    %c0_i32 = arith.constant 0 : i32
    %c0_i32_0 = arith.constant 0 : i32
    return %1, %c0_i32 : i32, i32
  }
  func.func @transform_3(%arg0: i32, %arg1: i32) -> (i32, i32) {
    %c0_i32 = arith.constant 0 : i32
    %c0_i32_0 = arith.constant 0 : i32
    %c0_i32_1 = arith.constant 0 : i32
    return %c0_i32, %c0_i32_0 : i32, i32
  }
  func.func @transform_4(%arg0: i32, %arg1: i32) -> (i32, i32) {
    %c0_i32 = arith.constant 0 : i32
    %c0_i32_0 = arith.constant 0 : i32
    %c0_i32_1 = arith.constant 0 : i32
    return %c0_i32, %c0_i32_0 : i32, i32
  }
  func.func @transform_5(%arg0: i32, %arg1: i32) -> (i32, i32) {
    %c0_i32 = arith.constant 0 : i32
    %c0_i32_0 = arith.constant 0 : i32
    %c0_i32_1 = arith.constant 0 : i32
    return %c0_i32, %c0_i32_0 : i32, i32
  }
  func.func @transform_6(%arg0: i32, %arg1: i32) -> (i32, i32) {
    %c0_i32 = arith.constant 0 : i32
    %c0_i32_0 = arith.constant 0 : i32
    %c0_i32_1 = arith.constant 0 : i32
    return %c0_i32, %c0_i32_0 : i32, i32
  }
  func.func @transform_7(%arg0: i32, %arg1: i32) -> (i32, i32, i32) {
    %c0_i32 = arith.constant 0 : i32
    %c0_i32_0 = arith.constant 0 : i32
    %c0_i32_1 = arith.constant 0 : i32
    return %arg0, %c0_i32, %c0_i32_0 : i32, i32, i32
  }
}

</mosaic_0001>

<llo_original>
// kernel: tpu_custom_call.1
$region0: #{tpu_custom_call.1}
  #allocation0 [shape = 'u32[]', space=smem, size = 0x4, offset = 0x4, fixed_abs, tag = 'smem constant byte address 0x4 - core index']
  #allocation1 [shape = 'u32[144,128]{1,0:T(1,128)}', space=vmem, size = 0x12000, scoped, tag = 'internal scratch']
  #allocation2 [shape = 'f32[8,256]{1,0:T(8,128)}', space=vmem, size = 0x2000, scoped, tag = 'scratch operand']
  #allocation3 [shape = 'f32[8,128]{1,0:T(8,128)}', space=vmem, size = 0x1000, scoped, tag = 'scratch operand']
  %s0 = inlined_call_operand.hbm [shape: f32[16,128], index: 0, kind: input, shape index: {}]
  %s1 = inlined_call_operand.hbm [shape: f32[16,128], index: 1, kind: input, shape index: {}]
  %s2 = inlined_call_operand.hbm [shape: f32[16,128], index: 2, kind: input, shape index: {}]
  %s3 = inlined_call_operand.hbm [shape: f32[256,128], index: 3, kind: input, shape index: {}]
  %s4 = inlined_call_operand.vmem [shape: f32[1,128], index: 4, kind: input, shape index: {}]
  %s5 = inlined_call_operand.hbm [shape: f32[128,128], index: 5, kind: input, shape index: {}]
  %s6 = inlined_call_operand.vmem [shape: f32[1,128], index: 6, kind: input, shape index: {}]
  %s7 = inlined_call_operand.hbm [shape: f32[2,1,128], index: 7, kind: output, shape index: {}]
  %s8 = sld [smem:[#allocation0]]
  $region89: #{tpu_custom_call.1} parent=0
    _
  %s10 = ssub.s32 1, %s8
  %s11 = scalar_select 0, %s10, %s8
  $region1: #{tpu_custom_call.1} parent=0
    #allocation4 [shape = 'u8[8192]{0}', space=vmem, size = 0x2000, scoped, tag = 'input window, operand 0']
    #allocation5 [shape = 's32[2]{0}', space=sflag, size = 0x8, scoped, tag = 'scoped memory for tpu_custom_call.1']
    #allocation6 [shape = 's32[2]{0}', space=sflag, size = 0x8, scoped, tag = 'scoped memory for tpu_custom_call.1']
    #allocation7 [shape = 'u8[8192]{0}', space=vmem, size = 0x2000, scoped, tag = 'input window, operand 1']
    #allocation8 [shape = 's32[2]{0}', space=sflag, size = 0x8, scoped, tag = 'scoped memory for tpu_custom_call.1']
    #allocation9 [shape = 'u8[8192]{0}', space=vmem, size = 0x2000, scoped, tag = 'input window, operand 2']
    #allocation10 [shape = 'u8[131072]{0}', space=vmem, size = 0x20000, scoped, tag = 'input window, operand 3, single buffered']
    #allocation11 [shape = 's32[1]{0}', space=sflag, size = 0x4, scoped, tag = 'scoped memory for tpu_custom_call.1']
    #allocation12 [shape = 'u8[65536]{0}', space=vmem, size = 0x10000, scoped, tag = 'input window, operand 5, single buffered']
    #allocation13 [shape = 'u8[1024]{0}', space=vmem, size = 0x400, scoped, tag = 'output window, operand 0']
    %12 = vsyncpa [#allocation5], 0
    %s13 = scalar_lea.sflag [#allocation5], 1
    %14 = vsyncpa %s13, 0
    %15 = vsyncpa [#allocation8], 0
    %s16 = scalar_lea.sflag [#allocation8], 1
    %17 = vsyncpa %s16, 0
    %18 = vsyncpa [#allocation11], 0
    %19 = vsyncpa [#allocation6], 0
    %s20 = scalar_lea.sflag [#allocation6], 1
    %21 = vsyncpa %s20, 0
    loop: start=0, step=1, limit=4
    $region2: #{tpu_custom_call.1} parent=1 // loop_pre_header
      _
    $region3: #{tpu_custom_call.1} parent=1 // loop_header
      %s23 = sphi 0, %s27
      %p24 = scmp.ge.s32.totalorder %s23, 4
      %s30 = sphi 0, %s42
      %s31 = sphi 0, %s38
      %s32 = sphi 0, %s30
      %s33 = sphi 0, %s31
      %s34 = sphi 0, %s32
      %s35 = sphi 0, %s33
      %s47 = sphi 0, %s49
      %s50 = sphi 0, %s47
      %s51 = sphi 0, %s50
      %s67 = sphi 0, %s51
      %s75 = sphi 0, %s77
      %s78 = sphi 0, %s75
      %s79 = sphi 0, %s78
      %s95 = sphi 0, %s79
      %s103 = sphi 0, %s105
      %s106 = sphi 0, %s103
      %s107 = sphi 0, %s106
      %s123 = sphi 0, %s107
      %s127 = sphi 0, %s127
      %s129 = sphi 0, %s127
      %s130 = sphi 0, %s129
      %s144 = sphi 0, %s130
      %s148 = sphi 0, %s148
      %s150 = sphi 0, %s148
      %s151 = sphi 0, %s150
      %s165 = sphi 0, %s151
      %s169 = sphi 0, %s169
      %s171 = sphi 0, %s169
      %s172 = sphi 0, %s171
      %s186 = sphi 0, %s172
      %s190 = sphi 0, %s190
      %s192 = sphi 0, %s190
      %s193 = sphi 0, %s192
      %s207 = sphi 0, %s193
      %s213 = sphi 0, %s215
      %s216 = sphi 0, %s213
      %s217 = sphi 0, %s216
      %s233 = sphi 0, %s217
    $region4: #{tpu_custom_call.1} parent=1 // loop_header_branch
      %26 = sbr.rel (%p24) target = $region8
    $region5: #{tpu_custom_call.1} parent=1 // loop_body
      %s28 = ssub.s32 %s23, 1
      %s29 = ssub.s32 %s23, 2
      %s36 = sadd.s32 1, %s31
      %p37 = scmp.ge.s32.totalorder %s36, 1
      %s38 = scalar_select %p37, 0, %s36
      %s39 = sadd.s32 1, %s30
      %s40 = scalar_select %p37, %s39, %s30
      %p41 = scmp.ge.s32.totalorder %s40, 2
      %s42 = scalar_select %p41, 0, %s40
      %s43 = sadd.s32 %s30, %s31
      %s44 = sadd.s32 %s42, %s38
      %s45 = ssub.s32 %s43, %s44
      %p46 = scmp.eq.s32.totalorder %s45, 0
      %s48 = sadd.s32 %s47, 1
      %s49 = scalar_select %p46, %s47, %s48
      %p52 = pneg %p46
      %p53 = scmp.eq.s32.totalorder %s23, 1
      %p54 = por %p52, %p53
      %p55 = scmp.ne.s32.totalorder %s47, %s50
      %p56 = scmp.eq.s32.totalorder %s23, 0
      %p57 = por %p55, %p56
      %p58 = scmp.ne.s32.totalorder %s47, %s50
      %p59 = scmp.eq.s32.totalorder %s28, 1
      %p60 = por %p58, %p59
      %p61 = scmp.ne.s32.totalorder %s50, %s51
      %p62 = scmp.eq.s32.totalorder %s28, 0
      %p63 = por %p61, %p62
      %p64 = scmp.ne.s32.totalorder %s50, %s51
      %p65 = scmp.eq.s32.totalorder %s29, 1
      %p66 = por %p64, %p65
      %p68 = scmp.ne.s32.totalorder %s51, %s67
      %p69 = scmp.eq.s32.totalorder %s29, 0
      %p70 = por %p68, %p69
      %s71 = sadd.s32 %s30, %s31
      %s72 = sadd.s32 %s42, %s38
      %s73 = ssub.s32 %s71, %s72
      %p74 = scmp.eq.s32.totalorder %s73, 0
      %s76 = sadd.s32 %s75, 1
      %s77 = scalar_select %p74, %s75, %s76
      %p80 = pneg %p74
      %p81 = scmp.eq.s32.totalorder %s23, 1
      %p82 = por %p80, %p81
      %p83 = scmp.ne.s32.totalorder %s75, %s78
      %p84 = scmp.eq.s32.totalorder %s23, 0
      %p85 = por %p83, %p84
      %p86 = scmp.ne.s32.totalorder %s75, %s78
      %p87 = scmp.eq.s32.totalorder %s28, 1
      %p88 = por %p86, %p87
      %p89 = scmp.ne.s32.totalorder %s78, %s79
      %p90 = scmp.eq.s32.totalorder %s28, 0
      %p91 = por %p89, %p90
      %p92 = scmp.ne.s32.totalorder %s78, %s79
      %p93 = scmp.eq.s32.totalorder %s29, 1
      %p94 = por %p92, %p93
      %p96 = scmp.ne.s32.totalorder %s79, %s95
      %p97 = scmp.eq.s32.totalorder %s29, 0
      %p98 = por %p96, %p97
      %s99 = sadd.s32 %s30, %s31
      %s100 = sadd.s32 %s42, %s38
      %s101 = ssub.s32 %s99, %s100
      %p102 = scmp.eq.s32.totalorder %s101, 0
      %s104 = sadd.s32 %s103, 1
      %s105 = scalar_select %p102, %s103, %s104
      %p108 = pneg %p102
      %p109 = scmp.eq.s32.totalorder %s23, 1
      %p110 = por %p108, %p109
      %p111 = scmp.ne.s32.totalorder %s103, %s106
      %p112 = scmp.eq.s32.totalorder %s23, 0
      %p113 = por %p111, %p112
      %p114 = scmp.ne.s32.totalorder %s103, %s106
      %p115 = scmp.eq.s32.totalorder %s28, 1
      %p116 = por %p114, %p115
      %p117 = scmp.ne.s32.totalorder %s106, %s107
      %p118 = scmp.eq.s32.totalorder %s28, 0
      %p119 = por %p117, %p118
      %p120 = scmp.ne.s32.totalorder %s106, %s107
      %p121 = scmp.eq.s32.totalorder %s29, 1
      %p122 = por %p120, %p121
      %p124 = scmp.ne.s32.totalorder %s107, %s123
      %p125 = scmp.eq.s32.totalorder %s29, 0
      %p126 = por %p124, %p125
      %s128 = sadd.s32 %s127, 1
      %p131 = scmp.eq.s32.totalorder %s23, 1
      %p132 = scmp.ne.s32.totalorder %s127, %s129
      %p133 = scmp.eq.s32.totalorder %s23, 0
      %p134 = por %p132, %p133
      %p135 = scmp.ne.s32.totalorder %s127, %s129
      %p136 = scmp.eq.s32.totalorder %s28, 1
      %p137 = por %p135, %p136
      %p138 = scmp.ne.s32.totalorder %s129, %s130
      %p139 = scmp.eq.s32.totalorder %s28, 0
      %p140 = por %p138, %p139
      %p141 = scmp.ne.s32.totalorder %s129, %s130
      %p142 = scmp.eq.s32.totalorder %s29, 1
      %p143 = por %p141, %p142
      %p145 = scmp.ne.s32.totalorder %s130, %s144
      %p146 = scmp.eq.s32.totalorder %s29, 0
      %p147 = por %p145, %p146
      %s149 = sadd.s32 %s148, 1
      %p152 = scmp.eq.s32.totalorder %s23, 1
      %p153 = scmp.ne.s32.totalorder %s148, %s150
      %p154 = scmp.eq.s32.totalorder %s23, 0
      %p155 = por %p153, %p154
      %p156 = scmp.ne.s32.totalorder %s148, %s150
      %p157 = scmp.eq.s32.totalorder %s28, 1
      %p158 = por %p156, %p157
      %p159 = scmp.ne.s32.totalorder %s150, %s151
      %p160 = scmp.eq.s32.totalorder %s28, 0
      %p161 = por %p159, %p160
      %p162 = scmp.ne.s32.totalorder %s150, %s151
      %p163 = scmp.eq.s32.totalorder %s29, 1
      %p164 = por %p162, %p163
      %p166 = scmp.ne.s32.totalorder %s151, %s165
      %p167 = scmp.eq.s32.totalorder %s29, 0
      %p168 = por %p166, %p167
      %s170 = sadd.s32 %s169, 1
      %p173 = scmp.eq.s32.totalorder %s23, 1
      %p174 = scmp.ne.s32.totalorder %s169, %s171
      %p175 = scmp.eq.s32.totalorder %s23, 0
      %p176 = por %p174, %p175
      %p177 = scmp.ne.s32.totalorder %s169, %s171
      %p178 = scmp.eq.s32.totalorder %s28, 1
      %p179 = por %p177, %p178
      %p180 = scmp.ne.s32.totalorder %s171, %s172
      %p181 = scmp.eq.s32.totalorder %s28, 0
      %p182 = por %p180, %p181
      %p183 = scmp.ne.s32.totalorder %s171, %s172
      %p184 = scmp.eq.s32.totalorder %s29, 1
      %p185 = por %p183, %p184
      %p187 = scmp.ne.s32.totalorder %s172, %s186
      %p188 = scmp.eq.s32.totalorder %s29, 0
      %p189 = por %p187, %p188
      %s191 = sadd.s32 %s190, 1
      %p194 = scmp.eq.s32.totalorder %s23, 1
      %p195 = scmp.ne.s32.totalorder %s190, %s192
      %p196 = scmp.eq.s32.totalorder %s23, 0
      %p197 = por %p195, %p196
      %p198 = scmp.ne.s32.totalorder %s190, %s192
      %p199 = scmp.eq.s32.totalorder %s28, 1
      %p200 = por %p198, %p199
      %p201 = scmp.ne.s32.totalorder %s192, %s193
      %p202 = scmp.eq.s32.totalorder %s28, 0
      %p203 = por %p201, %p202
      %p204 = scmp.ne.s32.totalorder %s192, %s193
      %p205 = scmp.eq.s32.totalorder %s29, 1
      %p206 = por %p204, %p205
      %p208 = scmp.ne.s32.totalorder %s193, %s207
      %p209 = scmp.eq.s32.totalorder %s29, 0
      %p210 = por %p208, %p209
      %s211 = ssub.s32 %s30, %s42
      %p212 = scmp.eq.s32.totalorder %s211, 0
      %s214 = sadd.s32 %s213, 1
      %s215 = scalar_select %p212, %s213, %s214
      %p218 = pneg %p212
      %p219 = scmp.eq.s32.totalorder %s23, 1
      %p220 = por %p218, %p219
      %p221 = scmp.ne.s32.totalorder %s213, %s216
      %p222 = scmp.eq.s32.totalorder %s23, 0
      %p223 = por %p221, %p222
      %p224 = scmp.ne.s32.totalorder %s213, %s216
      %p225 = scmp.eq.s32.totalorder %s28, 1
      %p226 = por %p224, %p225
      %p227 = scmp.ne.s32.totalorder %s216, %s217
      %p228 = scmp.eq.s32.totalorder %s28, 0
      %p229 = por %p227, %p228
      %p230 = scmp.ne.s32.totalorder %s216, %s217
      %p231 = scmp.eq.s32.totalorder %s29, 1
      %p232 = por %p230, %p231
      %p234 = scmp.ne.s32.totalorder %s217, %s233
      %p235 = scmp.eq.s32.totalorder %s29, 0
      %p236 = por %p234, %p235
      %p237 = scmp.le.s32.totalorder 1, %s23
      %p238 = scmp.lt.s32.totalorder %s23, 3
      %p239 = pnand %p237, %p238
      %p240 = pneg %p239
      // Predicated region
      $region9: #{tpu_custom_call.1} parent=5 // pred_check
        _
      $region10: #{tpu_custom_call.1} parent=5 // pred_check_branch
        %242 = sbr.rel (%p239) target = $region12
      $region11: #{tpu_custom_call.1} parent=5 // pred_region
        %s243 = ssub.s32 %s23, 1
        // Predicated region
        $region13: #{tpu_custom_call.1} parent=11 // pred_check
          %p244 = pneg %p140
        $region14: #{tpu_custom_call.1} parent=11 // pred_check_branch
          %246 = sbr.rel (%p244) target = $region16
        $region15: #{tpu_custom_call.1} parent=11 // pred_region
          %s248 = ssub.s32 4096, 4096
          %249 = vsyncadd [#allocation11], %s248
          %s250 = sshll.u32 [#allocation10], 4
          %s251 = int_to_ptr.vmem [resolvable:$true] %s250
          %256 = dma.hbm_to_vmem [thread:$0]  %s3, 4096, %s251, [#allocation11], 128, 128, 8
        $region16: #{tpu_custom_call.1} parent=11 // pred_fallthru
          _
        // Predicated region
        $region17: #{tpu_custom_call.1} parent=11 // pred_check
          %p257 = pneg %p161
        $region18: #{tpu_custom_call.1} parent=11 // pred_check_branch
          %259 = sbr.rel (%p257) target = $region20
        $region19: #{tpu_custom_call.1} parent=11 // pred_region
          _
        $region20: #{tpu_custom_call.1} parent=11 // pred_fallthru
          _
        // Predicated region
        $region21: #{tpu_custom_call.1} parent=11 // pred_check
          %p260 = pneg %p182
        $region22: #{tpu_custom_call.1} parent=11 // pred_check_branch
          %262 = sbr.rel (%p260) target = $region24
        $region23: #{tpu_custom_call.1} parent=11 // pred_region
          %s264 = ssub.s32 2048, 2048
          %265 = vsyncadd [#allocation11], %s264
          %s266 = sshll.u32 [#allocation12], 4
          %s267 = int_to_ptr.vmem [resolvable:$true] %s266
          %272 = dma.hbm_to_vmem [thread:$0]  %s5, 2048, %s267, [#allocation11], 128, 128, 8
        $region24: #{tpu_custom_call.1} parent=11 // pred_fallthru
          _
        // Predicated region
        $region25: #{tpu_custom_call.1} parent=11 // pred_check
          %p273 = pneg %p203
        $region26: #{tpu_custom_call.1} parent=11 // pred_check_branch
          %275 = sbr.rel (%p273) target = $region28
        $region27: #{tpu_custom_call.1} parent=11 // pred_region
          _
        $region28: #{tpu_custom_call.1} parent=11 // pred_fallthru
          _
      $region12: #{tpu_custom_call.1} parent=5 // pred_fallthru
        _
      %p276 = scmp.lt.s32.totalorder %s23, 2
      // Predicated region
      $region29: #{tpu_custom_call.1} parent=5 // pred_check
        %p277 = pneg %p276
      $region30: #{tpu_custom_call.1} parent=5 // pred_check_branch
        %279 = sbr.rel (%p277) target = $region32
      $region31: #{tpu_custom_call.1} parent=5 // pred_region
        // Predicated region
        $region33: #{tpu_custom_call.1} parent=31 // pred_check
          %p280 = pneg %p57
        $region34: #{tpu_custom_call.1} parent=31 // pred_check_branch
          %282 = sbr.rel (%p280) target = $region36
        $region35: #{tpu_custom_call.1} parent=31 // pred_region
          %s283 = sand.u32 %s47, 1
          %s284 = scalar_lea.sflag [#allocation5], %s283
          %s285 = sand.u32 %s47, 1
          %s286 = smul.addr %s285, 8
          %s287 = scalar_lea.vmem [#allocation4], %s286
          %s288 = sadd.s32 %s30, %s31
          %s290 = ssub.s32 128, 128
          %291 = vsyncadd %s284, %s290
          %s292 = smul.addr %s288, 128
          %s293 = scalar_lea.hbm %s0, %s292
          %s295 = sshll.u32 %s287, 4
          %s296 = int_to_ptr.vmem [resolvable:$true] %s295
          %298 = dma.hbm_to_vmem [thread:$0]  %s293, 128, %s296, %s284
        $region36: #{tpu_custom_call.1} parent=31 // pred_fallthru
          _
        // Predicated region
        $region37: #{tpu_custom_call.1} parent=31 // pred_check
          %p299 = pneg %p85
        $region38: #{tpu_custom_call.1} parent=31 // pred_check_branch
          %301 = sbr.rel (%p299) target = $region40
        $region39: #{tpu_custom_call.1} parent=31 // pred_region
          %s302 = sand.u32 %s23, 1
          %s303 = scalar_lea.sflag [#allocation8], %s302
          %s304 = sand.u32 %s75, 1
          %s305 = smul.addr %s304, 8
          %s306 = scalar_lea.vmem [#allocation7], %s305
          %s307 = sadd.s32 %s30, %s31
          %s309 = ssub.s32 128, 128
          %310 = vsyncadd %s303, %s309
          %s311 = smul.addr %s307, 128
          %s312 = scalar_lea.hbm %s1, %s311
          %s314 = sshll.u32 %s306, 4
          %s315 = int_to_ptr.vmem [resolvable:$true] %s314
          %317 = dma.hbm_to_vmem [thread:$0]  %s312, 128, %s315, %s303
        $region40: #{tpu_custom_call.1} parent=31 // pred_fallthru
          _
        // Predicated region
        $region41: #{tpu_custom_call.1} parent=31 // pred_check
          %p318 = pneg %p113
        $region42: #{tpu_custom_call.1} parent=31 // pred_check_branch
          %320 = sbr.rel (%p318) target = $region44
        $region43: #{tpu_custom_call.1} parent=31 // pred_region
          %s321 = sand.u32 %s23, 1
          %s322 = scalar_lea.sflag [#allocation8], %s321
          %s323 = sand.u32 %s103, 1
          %s324 = smul.addr %s323, 8
          %s325 = scalar_lea.vmem [#allocation9], %s324
          %s326 = sadd.s32 %s30, %s31
          %s328 = ssub.s32 128, 128
          %329 = vsyncadd %s322, %s328
          %s330 = smul.addr %s326, 128
          %s331 = scalar_lea.hbm %s2, %s330
          %s333 = sshll.u32 %s325, 4
          %s334 = int_to_ptr.vmem [resolvable:$true] %s333
          %336 = dma.hbm_to_vmem [thread:$0]  %s331, 128, %s334, %s322
        $region44: #{tpu_custom_call.1} parent=31 // pred_fallthru
          _
      $region32: #{tpu_custom_call.1} parent=5 // pred_fallthru
        _
      %p337 = scmp.le.s32.totalorder 1, %s23
      %p338 = scmp.lt.s32.totalorder %s23, 3
      %p339 = pnand %p337, %p338
      %p340 = pneg %p339
      // Predicated region
      $region45: #{tpu_custom_call.1} parent=5 // pred_check
        _
      $region46: #{tpu_custom_call.1} parent=5 // pred_check_branch
        %342 = sbr.rel (%p339) target = $region48
      $region47: #{tpu_custom_call.1} parent=5 // pred_region
        %s343 = ssub.s32 %s23, 1
        %s344 = sand.u32 %s50, 1
        %s345 = scalar_lea.sflag [#allocation5], %s344
        %s346 = sand.u32 %s50, 1
        %s347 = smul.addr %s346, 8
        %s348 = scalar_lea.vmem [#allocation4], %s347
        // Predicated region
        $region49: #{tpu_custom_call.1} parent=47 // pred_check
          %p349 = pneg %p63
        $region50: #{tpu_custom_call.1} parent=47 // pred_check_branch
          %351 = sbr.rel (%p349) target = $region52
        $region51: #{tpu_custom_call.1} parent=47 // pred_region
          %352 = dma.done %s345, 128
        $region52: #{tpu_custom_call.1} parent=47 // pred_fallthru
          _
        %s353 = sand.u32 %s28, 1
        %s354 = scalar_lea.sflag [#allocation8], %s353
        %s355 = sand.u32 %s78, 1
        %s356 = smul.addr %s355, 8
        %s357 = scalar_lea.vmem [#allocation7], %s356
        // Predicated region
        $region53: #{tpu_custom_call.1} parent=47 // pred_check
          %p358 = pneg %p91
        $region54: #{tpu_custom_call.1} parent=47 // pred_check_branch
          %360 = sbr.rel (%p358) target = $region56
        $region55: #{tpu_custom_call.1} parent=47 // pred_region
          %361 = dma.done %s354, 128
        $region56: #{tpu_custom_call.1} parent=47 // pred_fallthru
          _
        %s362 = sand.u32 %s28, 1
        %s363 = scalar_lea.sflag [#allocation8], %s362
        %s364 = sand.u32 %s106, 1
        %s365 = smul.addr %s364, 8
        %s366 = scalar_lea.vmem [#allocation9], %s365
        // Predicated region
        $region57: #{tpu_custom_call.1} parent=47 // pred_check
          %p367 = pneg %p119
        $region58: #{tpu_custom_call.1} parent=47 // pred_check_branch
          %369 = sbr.rel (%p367) target = $region60
        $region59: #{tpu_custom_call.1} parent=47 // pred_region
          %370 = dma.done %s363, 128
        $region60: #{tpu_custom_call.1} parent=47 // pred_fallthru
          _
        // Predicated region
        $region61: #{tpu_custom_call.1} parent=47 // pred_check
          %p371 = pneg %p140
        $region62: #{tpu_custom_call.1} parent=47 // pred_check_branch
          %373 = sbr.rel (%p371) target = $region64
        $region63: #{tpu_custom_call.1} parent=47 // pred_region
          %374 = dma.done [#allocation11], 4096
        $region64: #{tpu_custom_call.1} parent=47 // pred_fallthru
          _
        // Predicated region
        $region65: #{tpu_custom_call.1} parent=47 // pred_check
          %p375 = pneg %p182
        $region66: #{tpu_custom_call.1} parent=47 // pred_check_branch
          %377 = sbr.rel (%p375) target = $region68
        $region67: #{tpu_custom_call.1} parent=47 // pred_region
          %378 = dma.done [#allocation11], 2048
        $region68: #{tpu_custom_call.1} parent=47 // pred_fallthru
          _
        %s379 = sand.u32 %s50, 1
        %s380 = scalar_lea.sflag [#allocation5], %s379
        %s381 = sand.u32 %s50, 1
        %s382 = smul.addr %s381, 8
        %s383 = scalar_lea.vmem [#allocation4], %s382
        %p384 = pneg %p63
        %p385 = pneg %p60
        %s386 = sand.u32 %s28, 1
        %s387 = scalar_lea.sflag [#allocation8], %s386
        %s388 = sand.u32 %s78, 1
        %s389 = smul.addr %s388, 8
        %s390 = scalar_lea.vmem [#allocation7], %s389
        %p391 = pneg %p91
        %p392 = pneg %p88
        %s393 = sand.u32 %s28, 1
        %s394 = scalar_lea.sflag [#allocation8], %s393
        %s395 = sand.u32 %s106, 1
        %s396 = smul.addr %s395, 8
        %s397 = scalar_lea.vmem [#allocation9], %s396
        %p398 = pneg %p119
        %p399 = pneg %p116
        %p400 = pneg %p140
        %p401 = pneg %p137
        %p402 = pneg %p161
        %p403 = pneg %p158
        %p404 = pneg %p182
        %p405 = pneg %p179
        %p406 = pneg %p203
        %p407 = pneg %p200
        %p408 = pneg %p229
        %p409 = pneg %p226
        %s410 = sand.u32 %s216, 1
        %s411 = scalar_lea.sflag [#allocation6], %s410
        %s412 = sand.u32 %s216, 1
        %s413 = scalar_lea.vmem [#allocation13], %s412
        %s414 = sadd.s32 %s32, %s33
        %s415 = sadd.s32 %s32, %s33
        %s416 = sadd.s32 %s32, %s33
        %p417 = scmp.eq.s32.totalorder %s33, 0
        // Predicated region
        $region69: #{tpu_custom_call.1} parent=47 // pred_check
          %p418 = pneg %p417
        $region70: #{tpu_custom_call.1} parent=47 // pred_check_branch
          %420 = sbr.rel (%p418) target = $region72
        $region71: #{tpu_custom_call.1} parent=47 // pred_region
          %421 = vst [vmem:[#allocation3] sm:$0xff] 0.0
        $region72: #{tpu_custom_call.1} parent=47 // pred_fallthru
          _
        %v422 = vld [vmem:[%s348] sm:$0xff]
        %v423 = vld [vmem:[%s357] sm:$0xff]
        %v424 = vld [vmem:[%s366] sm:$0xff]
        %v425 = vsub.f32 1.0, %v424
        %427 = vset.pattern.permute.xlu0 0
        %428 = vperm.xlu0 %427, %v425
        %v429 = vpop.permute.xlu0 %428
        %v431 = vmul.f32 %v429, %v422
        %v432 = vmul.f32 %v424, 0.9999
        %v433 = vadd.f32 %v432, 0.0001
        %435 = vset.pattern.permute.xlu0 0
        %436 = vperm.xlu0 %435, %v433
        %v437 = vpop.permute.xlu0 %436
        %v439 = vmul.f32 %v437, %v423
        %v440 = vadd.f32 %v431, %v439
        %v441 = vmul.f32 %v423, 0.9999
        %v442 = vsub.f32 %v441, %v422
        %443 = vst [vmem:[#allocation2] sm:$0xff] %v440
        %444 = vst [vmem:[#allocation2 + $0x8] sm:$0xff] %v424
        %v445 = vld [vmem:[#allocation2] sm:$0xff]
        %v446 = vld [vmem:[#allocation2 + $0x8] sm:$0xff]
        %v447 = vld [vmem:[#allocation10] sm:$0xff]
        %v448 = vld [vmem:[#allocation10 + $0x8] sm:$0xff]
        %v449 = vld [vmem:[#allocation10 + $0x10] sm:$0xff]
        %v450 = vld [vmem:[#allocation10 + $0x18] sm:$0xff]
        %v451 = vld [vmem:[#allocation10 + $0x20] sm:$0xff]
        %v452 = vld [vmem:[#allocation10 + $0x28] sm:$0xff]
        %v453 = vld [vmem:[#allocation10 + $0x30] sm:$0xff]
        %v454 = vld [vmem:[#allocation10 + $0x38] sm:$0xff]
        %v455 = vld [vmem:[#allocation10 + $0x40] sm:$0xff]
        %v456 = vld [vmem:[#allocation10 + $0x48] sm:$0xff]
        %v457 = vld [vmem:[#allocation10 + $0x50] sm:$0xff]
        %v458 = vld [vmem:[#allocation10 + $0x58] sm:$0xff]
        %v459 = vld [vmem:[#allocation10 + $0x60] sm:$0xff]
        %v460 = vld [vmem:[#allocation10 + $0x68] sm:$0xff]
        %v461 = vld [vmem:[#allocation10 + $0x70] sm:$0xff]
        %v462 = vld [vmem:[#allocation10 + $0x78] sm:$0xff]
        %v463 = vld [vmem:[#allocation10 + $0x80] sm:$0xff]
        %v464 = vld [vmem:[#allocation10 + $0x88] sm:$0xff]
        %v465 = vld [vmem:[#allocation10 + $0x90] sm:$0xff]
        %v466 = vld [vmem:[#allocation10 + $0x98] sm:$0xff]
        %v467 = vld [vmem:[#allocation10 + $0xa0] sm:$0xff]
        %v468 = vld [vmem:[#allocation10 + $0xa8] sm:$0xff]
        %v469 = vld [vmem:[#allocation10 + $0xb0] sm:$0xff]
        %v470 = vld [vmem:[#allocation10 + $0xb8] sm:$0xff]
        %v471 = vld [vmem:[#allocation10 + $0xc0] sm:$0xff]
        %v472 = vld [vmem:[#allocation10 + $0xc8] sm:$0xff]
        %v473 = vld [vmem:[#allocation10 + $0xd0] sm:$0xff]
        %v474 = vld [vmem:[#allocation10 + $0xd8] sm:$0xff]
        %v475 = vld [vmem:[#allocation10 + $0xe0] sm:$0xff]
        %v476 = vld [vmem:[#allocation10 + $0xe8] sm:$0xff]
        %v477 = vld [vmem:[#allocation10 + $0xf0] sm:$0xff]
        %v478 = vld [vmem:[#allocation10 + $0xf8] sm:$0xff]
        %v479 = vld [vmem:[%s4] sm:$0x1]
        %v481 = vlaneseq
        %v482 = vshrl.u32 %v481, 7
        %v483 = vsub.s32 0, %v482
        %v484 = vrot.slane %v479, %v483
        %486 = vmatprep.subr.mxu0 0.0
        %487 = vmatpush1.msra.mxu0 %v462
        %488 = vmatprep.subr.mxu0 0.0
        %489 = vmatpush1.msra.mxu0 %v461
        %490 = vmatprep.subr.mxu0 0.0
        %491 = vmatpush1.msra.mxu0 %v460
        %492 = vmatprep.subr.mxu0 0.0
        %493 = vmatpush1.msra.mxu0 %v459
        %494 = vmatprep.subr.mxu0 0.0
        %495 = vmatpush1.msra.mxu0 %v458
        %496 = vmatprep.subr.mxu0 0.0
        %497 = vmatpush1.msra.mxu0 %v457
        %498 = vmatprep.subr.mxu0 0.0
        %499 = vmatpush1.msra.mxu0 %v456
        %500 = vmatprep.subr.mxu0 0.0
        %501 = vmatpush1.msra.mxu0 %v455
        %502 = vmatprep.subr.mxu0 0.0
        %503 = vmatpush1.msra.mxu0 %v454
        %504 = vmatprep.subr.mxu0 0.0
        %505 = vmatpush1.msra.mxu0 %v453
        %506 = vmatprep.subr.mxu0 0.0
        %507 = vmatpush1.msra.mxu0 %v452
        %508 = vmatprep.subr.mxu0 0.0
        %509 = vmatpush1.msra.mxu0 %v451
        %510 = vmatprep.subr.mxu0 0.0
        %511 = vmatpush1.msra.mxu0 %v450
        %512 = vmatprep.subr.mxu0 0.0
        %513 = vmatpush1.msra.mxu0 %v449
        %514 = vmatprep.subr.mxu0 0.0
        %515 = vmatpush1.msra.mxu0 %v448
        %516 = vmatprep.subr.mxu0 0.0
        %517 = vmatpush1.msra.mxu0 %v447
        %518 = vmatprep.subr.mxu0 0.0
        %519 = vmatpush2.msra.mxu0 %v478
        %520 = vmatprep.subr.mxu0 0.0
        %521 = vmatpush2.msra.mxu0 %v477
        %522 = vmatprep.subr.mxu0 0.0
        %523 = vmatpush2.msra.mxu0 %v476
        %524 = vmatprep.subr.mxu0 0.0
        %525 = vmatpush2.msra.mxu0 %v475
        %526 = vmatprep.subr.mxu0 0.0
        %527 = vmatpush2.msra.mxu0 %v474
        %528 = vmatprep.subr.mxu0 0.0
        %529 = vmatpush2.msra.mxu0 %v473
        %530 = vmatprep.subr.mxu0 0.0
        %531 = vmatpush2.msra.mxu0 %v472
        %532 = vmatprep.subr.mxu0 0.0
        %533 = vmatpush2.msra.mxu0 %v471
        %534 = vmatprep.subr.mxu0 0.0
        %535 = vmatpush2.msra.mxu0 %v470
        %536 = vmatprep.subr.mxu0 0.0
        %537 = vmatpush2.msra.mxu0 %v469
        %538 = vmatprep.subr.mxu0 0.0
        %539 = vmatpush2.msra.mxu0 %v468
        %540 = vmatprep.subr.mxu0 0.0
        %541 = vmatpush2.msra.mxu0 %v467
        %542 = vmatprep.subr.mxu0 0.0
        %543 = vmatpush2.msra.mxu0 %v466
        %544 = vmatprep.subr.mxu0 0.0
        %545 = vmatpush2.msra.mxu0 %v465
        %546 = vmatprep.subr.mxu0 0.0
        %547 = vmatpush2.msra.mxu0 %v464
        %548 = vmatprep.subr.mxu0 0.0
        %549 = vmatpush2.msra.mxu0 %v463
        %550 = vmatprep.mubr.f32.mxu0 %v446
        %551 = vmatmul.mubr.f32.gmra.mxu0 %v445
        %v552 = vpop.f32.mrf.mxu0
        %v553 = vadd.f32 %v484, %v552
        %v554 = vpop.f32.mrf.mxu0
        %555 = vdwg.mxu0
        %v556 = vtanh.pop %v553
        %v557 = vld [vmem:[#allocation12] sm:$0xff]
        %v558 = vld [vmem:[#allocation12 + $0x8] sm:$0xff]
        %v559 = vld [vmem:[#allocation12 + $0x10] sm:$0xff]
        %v560 = vld [vmem:[#allocation12 + $0x18] sm:$0xff]
        %v561 = vld [vmem:[#allocation12 + $0x20] sm:$0xff]
        %v562 = vld [vmem:[#allocation12 + $0x28] sm:$0xff]
        %v563 = vld [vmem:[#allocation12 + $0x30] sm:$0xff]
        %v564 = vld [vmem:[#allocation12 + $0x38] sm:$0xff]
        %v565 = vld [vmem:[#allocation12 + $0x40] sm:$0xff]
        %v566 = vld [vmem:[#allocation12 + $0x48] sm:$0xff]
        %v567 = vld [vmem:[#allocation12 + $0x50] sm:$0xff]
        %v568 = vld [vmem:[#allocation12 + $0x58] sm:$0xff]
        %v569 = vld [vmem:[#allocation12 + $0x60] sm:$0xff]
        %v570 = vld [vmem:[#allocation12 + $0x68] sm:$0xff]
        %v571 = vld [vmem:[#allocation12 + $0x70] sm:$0xff]
        %v572 = vld [vmem:[#allocation12 + $0x78] sm:$0xff]
        %v573 = vld [vmem:[%s6] sm:$0x1]
        %v575 = vlaneseq
        %v576 = vshrl.u32 %v575, 7
        %v577 = vsub.s32 0, %v576
        %v578 = vrot.slane %v573, %v577
        %580 = vmatprep.subr.mxu0 0.0
        %581 = vmatpush1.msra.mxu0 %v572
        %582 = vmatprep.subr.mxu0 0.0
        %583 = vmatpush1.msra.mxu0 %v571
        %584 = vmatprep.subr.mxu0 0.0
        %585 = vmatpush1.msra.mxu0 %v570
        %586 = vmatprep.subr.mxu0 0.0
        %587 = vmatpush1.msra.mxu0 %v569
        %588 = vmatprep.subr.mxu0 0.0
        %589 = vmatpush1.msra.mxu0 %v568
        %590 = vmatprep.subr.mxu0 0.0
        %591 = vmatpush1.msra.mxu0 %v567
        %592 = vmatprep.subr.mxu0 0.0
        %593 = vmatpush1.msra.mxu0 %v566
        %594 = vmatprep.subr.mxu0 0.0
        %595 = vmatpush1.msra.mxu0 %v565
        %596 = vmatprep.subr.mxu0 0.0
        %597 = vmatpush1.msra.mxu0 %v564
        %598 = vmatprep.subr.mxu0 0.0
        %599 = vmatpush1.msra.mxu0 %v563
        %600 = vmatprep.subr.mxu0 0.0
        %601 = vmatpush1.msra.mxu0 %v562
        %602 = vmatprep.subr.mxu0 0.0
        %603 = vmatpush1.msra.mxu0 %v561
        %604 = vmatprep.subr.mxu0 0.0
        %605 = vmatpush1.msra.mxu0 %v560
        %606 = vmatprep.subr.mxu0 0.0
        %607 = vmatpush1.msra.mxu0 %v559
        %608 = vmatprep.subr.mxu0 0.0
        %609 = vmatpush1.msra.mxu0 %v558
        %610 = vmatprep.subr.mxu0 0.0
        %611 = vmatpush1.msra.mxu0 %v557
        %612 = vmatprep.subr.mxu0 0.0
        %613 = vmatpush2.msra.mxu0 0.0
        %614 = vmatprep.subr.mxu0 0.0
        %615 = vmatpush2.msra.mxu0 0.0
        %616 = vmatprep.subr.mxu0 0.0
        %617 = vmatpush2.msra.mxu0 0.0
        %618 = vmatprep.subr.mxu0 0.0
        %619 = vmatpush2.msra.mxu0 0.0
        %620 = vmatprep.subr.mxu0 0.0
        %621 = vmatpush2.msra.mxu0 0.0
        %622 = vmatprep.subr.mxu0 0.0
        %623 = vmatpush2.msra.mxu0 0.0
        %624 = vmatprep.subr.mxu0 0.0
        %625 = vmatpush2.msra.mxu0 0.0
        %626 = vmatprep.subr.mxu0 0.0
        %627 = vmatpush2.msra.mxu0 0.0
        %628 = vmatprep.subr.mxu0 0.0
        %629 = vmatpush2.msra.mxu0 0.0
        %630 = vmatprep.subr.mxu0 0.0
        %631 = vmatpush2.msra.mxu0 0.0
        %632 = vmatprep.subr.mxu0 0.0
        %633 = vmatpush2.msra.mxu0 0.0
        %634 = vmatprep.subr.mxu0 0.0
        %635 = vmatpush2.msra.mxu0 0.0
        %636 = vmatprep.subr.mxu0 0.0
        %637 = vmatpush2.msra.mxu0 0.0
        %638 = vmatprep.subr.mxu0 0.0
        %639 = vmatpush2.msra.mxu0 0.0
        %640 = vmatprep.subr.mxu0 0.0
        %641 = vmatpush2.msra.mxu0 0.0
        %642 = vmatprep.subr.mxu0 0.0
        %643 = vmatpush2.msra.mxu0 0.0
        %644 = vmatprep.mubr.f32.mxu0 0.0
        %645 = vmatmul.mubr.f32.gmra.mxu0 %v556
        %v646 = vpop.f32.mrf.mxu0
        %v647 = vadd.f32 %v578, %v646
        %v648 = vpop.f32.mrf.mxu0
        %649 = vdwg.mxu0
        %v650 = vsub.f32 %v647, %v442
        %v651 = vld [vmem:[#allocation3] sm:$0xff]
        %v652 = vmul.f32 %v650, %v650
        %v653 = vadd.f32 %v651, %v652
        %654 = vst [vmem:[#allocation3] sm:$0xff] %v653
        // Predicated region
        $region73: #{tpu_custom_call.1} parent=47 // pred_check
          %p655 = pneg %p417
        $region74: #{tpu_custom_call.1} parent=47 // pred_check_branch
          %657 = sbr.rel (%p655) target = $region76
        $region75: #{tpu_custom_call.1} parent=47 // pred_region
          %v658 = vld [vmem:[#allocation3] sm:$0xff]
          %v659 = vrot.slane %v658, 4
          %v660 = vadd.f32 %v658, %v659
          %v661 = vrot.slane %v660, 2
          %v662 = vadd.f32 %v660, %v661
          %v663 = vrot.slane %v662, 1
          %v664 = vadd.f32 %v662, %v663
          %665 = vst [vmem:[%s413] sm:$0x1] %v664
        $region76: #{tpu_custom_call.1} parent=47 // pred_fallthru
          _
        %s666 = sand.u32 %s216, 1
        %s667 = scalar_lea.sflag [#allocation6], %s666
        %s668 = sand.u32 %s216, 1
        %s669 = scalar_lea.vmem [#allocation13], %s668
        // Predicated region
        $region77: #{tpu_custom_call.1} parent=47 // pred_check
          %p670 = pneg %p226
        $region78: #{tpu_custom_call.1} parent=47 // pred_check_branch
          %672 = sbr.rel (%p670) target = $region80
        $region79: #{tpu_custom_call.1} parent=47 // pred_region
          %s674 = ssub.s32 16, 16
          %675 = vsyncadd %s667, %s674
          %s676 = smul.addr %s32, 16
          %s677 = scalar_lea.hbm %s7, %s676
          %s679 = sshll.u32 %s669, 4
          %s680 = int_to_ptr.vmem [resolvable:$true] %s679
          %682 = dma.vmem_to_hbm [thread:$0]  %s680, 16, %s677, %s667
        $region80: #{tpu_custom_call.1} parent=47 // pred_fallthru
          _
      $region48: #{tpu_custom_call.1} parent=5 // pred_fallthru
        _
      %p683 = scmp.le.s32.totalorder 2, %s23
      // Predicated region
      $region81: #{tpu_custom_call.1} parent=5 // pred_check
        %p684 = pneg %p683
      $region82: #{tpu_custom_call.1} parent=5 // pred_check_branch
        %686 = sbr.rel (%p684) target = $region84
      $region83: #{tpu_custom_call.1} parent=5 // pred_region
        %s687 = ssub.s32 %s23, 2
        // Predicated region
        $region85: #{tpu_custom_call.1} parent=83 // pred_check
          %p688 = pneg %p232
        $region86: #{tpu_custom_call.1} parent=83 // pred_check_branch
          %690 = sbr.rel (%p688) target = $region88
        $region87: #{tpu_custom_call.1} parent=83 // pred_region
          %s691 = sand.u32 %s217, 1
          %s692 = scalar_lea.sflag [#allocation6], %s691
          %s693 = sand.u32 %s217, 1
          %s694 = scalar_lea.vmem [#allocation13], %s693
          %695 = dma.done %s692, 16
        $region88: #{tpu_custom_call.1} parent=83 // pred_fallthru
          _
      $region84: #{tpu_custom_call.1} parent=5 // pred_fallthru
        _
    $region6: #{tpu_custom_call.1} parent=1 // loop_footer
      %s27 = sadd.s32 1, %s23
    $region7: #{tpu_custom_call.1} parent=1 // loop_footer_branch
      %22 = sbr.rel target = $region3
    $region8: #{tpu_custom_call.1} parent=1 // loop_exit
      _
    %696 = vsyncpa [#allocation5], 1
    %s697 = scalar_lea.sflag [#allocation5], 1
    %698 = vsyncpa %s697, 1
    %699 = vsyncpa [#allocation8], 1
    %s700 = scalar_lea.sflag [#allocation8], 1
    %701 = vsyncpa %s700, 1
    %702 = vsyncpa [#allocation11], 1
    %703 = vsyncpa [#allocation6], 1
    %s704 = scalar_lea.sflag [#allocation6], 1
    %705 = vsyncpa %s704, 1

</llo_original>
